<compile_context>
chip_gen: v7x
topology: tpu7x:2x2x1
jax: 0.10.0
libtpu: 0.0.40
codegen_flags: <defaults>
</compile_context>

<pallas_src>
import functools

import jax
import jax.numpy as jnp
from jax import lax
from jax.experimental import pallas as pl
from jax.experimental.pallas import tpu as pltpu

LANES = 128
SUBLANES = 8
ROW_ALIGN = SUBLANES * LANES       # 1024-element pad granularity (<= 1023 pad elems)
MAX_TILE_ROWS = 8192               # (8192,128) f32 = 4 MiB / input block
CHUNK_ROWS = 128                   # rows per register-resident inner chunk
PRED_PAD = -200.0                  # exp(-200) == 0 in f32  ->  padded loss is exactly 0
VMEM_LIMIT_BYTES = 32 * 1024 * 1024


def _round_up(x, m):
    return (x + m - 1) // m * m


def _bce_blur_kernel(pred_ref, true_ref, out_ref, *, inv_alpha, n_rows_valid, need_mask):
    tile_r = pred_ref.shape[0]

    if need_mask:
        # Rows of this block that hold real data; >= tile_r except on the ragged
        # final block (whose un-DMA'd VMEM tail is garbage and must be masked).
        rows_left = n_rows_valid - pl.program_id(0) * tile_r
    else:
        rows_left = None

    def chunk_loss_sum(row0, nrows):
        x = pred_ref[pl.ds(row0, nrows), :].astype(jnp.float32)
        z = true_ref[pl.ds(row0, nrows), :].astype(jnp.float32)
        # Numerically-stable BCE with logits (reduction='none'):
        #   bce = max(x, 0) - x*z + log1p(exp(-|x|))
        e = jnp.exp(-jnp.abs(x))
        bce = jnp.maximum(x, 0.0) - x * z + jnp.log1p(e)
        p = 0.5 * jnp.tanh(0.5 * x) + 0.5          # sigmoid(x), one EUP tanh
        dx = p - z
        alpha_factor = 1.0 - jnp.exp((dx - 1.0) * inv_alpha)
        loss = bce * alpha_factor
        if rows_left is not None:
            ridx = lax.broadcasted_iota(jnp.int32, loss.shape, 0)
            loss = jnp.where(ridx < rows_left - row0, loss, 0.0)
        # Elementwise (VPU-only) fold into one (8,128) tile; no cross-lane reduce.
        return loss.reshape(-1, SUBLANES, LANES).sum(axis=0)

    acc = jnp.zeros((SUBLANES, LANES), jnp.float32)
    num_full = tile_r // CHUNK_ROWS
    rem_rows = tile_r - num_full * CHUNK_ROWS      # multiple of 8 by construction

    if num_full > 0:
        def body(j, a):
            row0 = pl.multiple_of(j * CHUNK_ROWS, CHUNK_ROWS)
            return a + chunk_loss_sum(row0, CHUNK_ROWS)
        acc = lax.fori_loop(0, num_full, body, acc)
    if rem_rows > 0:
        acc = acc + chunk_loss_sum(num_full * CHUNK_ROWS, rem_rows)

    out_ref[0] = acc


def bce_blur_with_logits_loss(pred, true, alpha=0.05):
    assert pred.shape == true.shape
    n = pred.size
    if n == 0:
        # torch's mean over an empty tensor is NaN.
        return jnp.array(jnp.nan, dtype=jnp.float32)

    inv_alpha = 1.0 / (alpha + 0.0001)             # fold the divide into a constant

    def to_flat(x):
        f = x.reshape(-1)
        if f.dtype != jnp.float32 and f.dtype != jnp.bfloat16:
            f = f.astype(jnp.float32)              # f32/bf16 pass through; cast in-kernel
        return f

    pred_flat = to_flat(pred)
    true_flat = to_flat(true)

    n_pad = _round_up(n, ROW_ALIGN)
    if n_pad != n:
        # TODO(synk): this tail pad is a full HBM copy; only taken when n % 1024 != 0
        # (rare for conv-head outputs).  Padded elements contribute exactly 0 loss.
        pred_flat = jnp.pad(pred_flat, (0, n_pad - n), constant_values=PRED_PAD)
        true_flat = jnp.pad(true_flat, (0, n_pad - n), constant_values=0)

    n_rows = n_pad // LANES                         # multiple of 8
    tile_r = MAX_TILE_ROWS if n_rows >= MAX_TILE_ROWS else n_rows
    num_blocks = pl.cdiv(n_rows, tile_r)
    need_mask = (n_rows % tile_r) != 0              # trace-time: ragged final block?

    pred_slab = pred_flat.reshape(n_rows, LANES)    # free reshape of contiguous array
    true_slab = true_flat.reshape(n_rows, LANES)

    bytes_accessed = (pred_slab.size * pred_slab.dtype.itemsize
                      + true_slab.size * true_slab.dtype.itemsize
                      + num_blocks * SUBLANES * LANES * 4)

    kernel = functools.partial(_bce_blur_kernel, inv_alpha=inv_alpha,
                               n_rows_valid=n_rows, need_mask=need_mask)

    partials = pl.pallas_call(
        kernel,
        out_shape=jax.ShapeDtypeStruct((num_blocks, SUBLANES, LANES), jnp.float32),
        grid=(num_blocks,),
        in_specs=[
            pl.BlockSpec((tile_r, LANES), lambda i: (i, 0)),
            pl.BlockSpec((tile_r, LANES), lambda i: (i, 0)),
        ],
        out_specs=pl.BlockSpec((1, SUBLANES, LANES), lambda i: (i, 0, 0)),
        compiler_params=pltpu.CompilerParams(
            dimension_semantics=("parallel",),      # blocks are independent -> megacore-splittable
            vmem_limit_bytes=VMEM_LIMIT_BYTES,
        ),
        cost_estimate=pl.CostEstimate(
            flops=20 * n, transcendentals=4 * n, bytes_accessed=int(bytes_accessed)),
    )(pred_slab, true_slab)

    # Tiny final cross-lane reduce + mean normalization outside the kernel.
    return jnp.sum(partials) / n


def _reference(pred, true, alpha=0.05):
    x = pred.astype(jnp.float32)
    z = true.astype(jnp.float32)
    bce = jnp.maximum(x, 0.0) - x * z + jnp.log1p(jnp.exp(-jnp.abs(x)))
    p = jax.nn.sigmoid(x)
    dx = p - z
    af = 1.0 - jnp.exp((dx - 1.0) / (alpha + 0.0001))
    return jnp.mean(bce * af)


if __name__ == "__main__":
    key = jax.random.PRNGKey(0)
    k1, k2, k3, k4 = jax.random.split(key, 4)

    # NCHW, like the PyTorch module would receive from a conv head.
    pred = jax.random.normal(k1, (2, 4, 16, 16), dtype=jnp.float32)
    true = (jax.random.uniform(k2, (2, 4, 16, 16)) > 0.5).astype(jnp.float32)

    out = bce_blur_with_logits_loss(pred, true, alpha=0.05)
    out = jax.block_until_ready(out)
    ref = _reference(pred, true, alpha=0.05)
    assert jnp.allclose(out, ref, atol=1e-5, rtol=1e-5), (out, ref)

    # Second small check: non-1024-aligned size exercises the exact-zero pad path.
    pred2 = jax.random.normal(k3, (1, 5, 9, 7), dtype=jnp.float32)
    true2 = (jax.random.uniform(k4, (1, 5, 9, 7)) > 0.5).astype(jnp.float32)
    out2 = jax.block_until_ready(bce_blur_with_logits_loss(pred2, true2, alpha=0.05))
    ref2 = _reference(pred2, true2, alpha=0.05)
    assert jnp.allclose(out2, ref2, atol=1e-5, rtol=1e-5), (out2, ref2)

    print("KERNEL_OK")
</pallas_src>

<mosaic_0001>
module attributes {stable_mosaic.version = 11 : i64} {
  func.func @_bce_blur_kernel(%arg0: i32, %arg1: memref<16x128xf32, #tpu.memory_space<vmem>>, %arg2: memref<16x128xf32, #tpu.memory_space<vmem>>, %arg3: memref<1x8x128xf32, #tpu.memory_space<vmem>>) attributes {dimension_semantics = [#tpu.dimension_semantics<parallel>], iteration_bounds = array<i64: 1>, scalar_prefetch = 0 : i64, scratch_operands = 0 : i64, tpu.core_type = #tpu.core_type<tc>, window_params = [{transform_indices = @transform_0, window_bounds = array<i64: 16, 128>}, {transform_indices = @transform_1, window_bounds = array<i64: 16, 128>}, {transform_indices = @transform_2, window_bounds = array<i64: 1, 8, 128>}]} {
    %cst = arith.constant 0.000000e+00 : f32
    %0 = vector.broadcast %cst : f32 to vector<8x128xf32>
    %c0 = arith.constant 0 : index
    %c0_0 = arith.constant 0 : index
    %1 = vector.load %arg1[%c0, %c0_0] : memref<16x128xf32, #tpu.memory_space<vmem>>, vector<16x128xf32>
    %c0_1 = arith.constant 0 : index
    %c0_2 = arith.constant 0 : index
    %2 = vector.load %arg2[%c0_1, %c0_2] : memref<16x128xf32, #tpu.memory_space<vmem>>, vector<16x128xf32>
    %3 = math.absf %1 : vector<16x128xf32>
    %cst_3 = arith.constant 0.000000e+00 : f32
    %4 = vector.broadcast %cst_3 : f32 to vector<16x128xf32>
    %5 = arith.subf %4, %3 : vector<16x128xf32>
    %6 = math.exp %5 : vector<16x128xf32>
    %cst_4 = arith.constant 0.000000e+00 : f32
    %7 = vector.broadcast %cst_4 : f32 to vector<16x128xf32>
    %8 = arith.maximumf %1, %7 : vector<16x128xf32>
    %9 = arith.mulf %1, %2 : vector<16x128xf32>
    %10 = arith.subf %8, %9 : vector<16x128xf32>
    %11 = math.log1p %6 : vector<16x128xf32>
    %12 = arith.addf %10, %11 : vector<16x128xf32>
    %cst_5 = arith.constant 5.000000e-01 : f32
    %13 = vector.broadcast %cst_5 : f32 to vector<16x128xf32>
    %14 = arith.mulf %13, %1 : vector<16x128xf32>
    %15 = math.tanh %14 : vector<16x128xf32>
    %cst_6 = arith.constant 5.000000e-01 : f32
    %16 = vector.broadcast %cst_6 : f32 to vector<16x128xf32>
    %17 = arith.mulf %16, %15 : vector<16x128xf32>
    %cst_7 = arith.constant 5.000000e-01 : f32
    %18 = vector.broadcast %cst_7 : f32 to vector<16x128xf32>
    %19 = arith.addf %17, %18 : vector<16x128xf32>
    %20 = arith.subf %19, %2 : vector<16x128xf32>
    %cst_8 = arith.constant 1.000000e+00 : f32
    %21 = vector.broadcast %cst_8 : f32 to vector<16x128xf32>
    %22 = arith.subf %20, %21 : vector<16x128xf32>
    %cst_9 = arith.constant 19.9600792 : f32
    %23 = vector.broadcast %cst_9 : f32 to vector<16x128xf32>
    %24 = arith.mulf %22, %23 : vector<16x128xf32>
    %25 = math.exp %24 : vector<16x128xf32>
    %cst_10 = arith.constant 1.000000e+00 : f32
    %26 = vector.broadcast %cst_10 : f32 to vector<16x128xf32>
    %27 = arith.subf %26, %25 : vector<16x128xf32>
    %28 = arith.mulf %12, %27 : vector<16x128xf32>
    %29 = vector.shape_cast %28 : vector<16x128xf32> to vector<2x8x128xf32>
    %cst_11 = arith.constant dense<0.000000e+00> : vector<8x128xf32>
    %30 = vector.multi_reduction <add>, %29, %cst_11 [0] : vector<2x8x128xf32> to vector<8x128xf32>
    %31 = arith.addf %0, %30 : vector<8x128xf32>
    %c0_12 = arith.constant 0 : index
    %c0_13 = arith.constant 0 : index
    %c0_14 = arith.constant 0 : index
    %32 = vector.load %arg3[%c0_12, %c0_13, %c0_14] : memref<1x8x128xf32, #tpu.memory_space<vmem>>, vector<1x8x128xf32>
    %33 = vector.shape_cast %32 : vector<1x8x128xf32> to vector<8x128xf32>
    %34 = vector.shape_cast %31 : vector<8x128xf32> to vector<1x8x128xf32>
    tpu.vector_store %arg3[%c0_12, %c0_13, %c0_14], %34 {strides = array<i32>} : memref<1x8x128xf32, #tpu.memory_space<vmem>>, vector<1x8x128xf32>,
    return
  }
  func.func @transform_0(%arg0: i32) -> (i32, i32) {
    %c0_i32 = arith.constant 0 : i32
    %c0_i32_0 = arith.constant 0 : i32
    return %arg0, %c0_i32 : i32, i32
  }
  func.func @transform_1(%arg0: i32) -> (i32, i32) {
    %c0_i32 = arith.constant 0 : i32
    %c0_i32_0 = arith.constant 0 : i32
    return %arg0, %c0_i32 : i32, i32
  }
  func.func @transform_2(%arg0: i32) -> (i32, i32, i32) {
    %c0_i32 = arith.constant 0 : i32
    %c0_i32_0 = arith.constant 0 : i32
    %c0_i32_1 = arith.constant 0 : i32
    return %arg0, %c0_i32, %c0_i32_0 : i32, i32, i32
  }
}

</mosaic_0001>

<llo_original>
// kernel: tpu_custom_call.1
$region0: #{tpu_custom_call.1}
  #allocation0 [shape = 'u32[]', space=smem, size = 0x4, offset = 0x4, fixed_abs, tag = 'smem constant byte address 0x4 - core index']
  #allocation1 [shape = 'u32[144,128]{1,0:T(1,128)}', space=vmem, size = 0x12000, scoped, tag = 'internal scratch']
  %s0 = inlined_call_operand.hbm [shape: f32[16,128], index: 0, kind: input, shape index: {}]
  %s1 = inlined_call_operand.hbm [shape: f32[16,128], index: 1, kind: input, shape index: {}]
  %s2 = inlined_call_operand.hbm [shape: f32[1,8,128], index: 2, kind: output, shape index: {}]
  %s3 = sld [smem:[#allocation0]]
  $region26: #{tpu_custom_call.1} parent=0
    _
  %s5 = ssub.s32 1, %s3
  %s6 = scalar_select 0, %s5, %s3
  $region1: #{tpu_custom_call.1} parent=0
    #allocation2 [shape = 'u8[8192]{0}', space=vmem, size = 0x2000, scoped, tag = 'input window, operand 0, single buffered']
    #allocation3 [shape = 's32[1]{0}', space=sflag, size = 0x4, scoped, tag = 'scoped memory for tpu_custom_call.1']
    #allocation4 [shape = 's32[1]{0}', space=sflag, size = 0x4, scoped, tag = 'scoped memory for tpu_custom_call.1']
    #allocation5 [shape = 'u8[8192]{0}', space=vmem, size = 0x2000, scoped, tag = 'input window, operand 1, single buffered']
    #allocation6 [shape = 's32[1]{0}', space=sflag, size = 0x4, scoped, tag = 'scoped memory for tpu_custom_call.1']
    #allocation7 [shape = 'u8[4096]{0}', space=vmem, size = 0x1000, scoped, tag = 'output window, operand 0, single buffered']
    %7 = vsyncpa [#allocation3], 0
    %8 = vsyncpa [#allocation6], 0
    %9 = vsyncpa [#allocation4], 0
    // Predicated region
    $region2: #{tpu_custom_call.1} parent=1 // pred_check
      _
    $region3: #{tpu_custom_call.1} parent=1 // pred_check_branch
      %11 = sbr.rel (0) target = $region5
    $region4: #{tpu_custom_call.1} parent=1 // pred_region
      %s13 = ssub.s32 256, 256
      %14 = vsyncadd [#allocation3], %s13
      %s15 = sshll.u32 [#allocation2], 4
      %s16 = int_to_ptr.vmem [resolvable:$true] %s15
      %21 = dma.hbm_to_vmem [thread:$0]  %s0, 256, %s16, [#allocation3], 128, 128, 8
    $region5: #{tpu_custom_call.1} parent=1 // pred_fallthru
      _
    // Predicated region
    $region6: #{tpu_custom_call.1} parent=1 // pred_check
      _
    $region7: #{tpu_custom_call.1} parent=1 // pred_check_branch
      %23 = sbr.rel (0) target = $region9
    $region8: #{tpu_custom_call.1} parent=1 // pred_region
      %s25 = ssub.s32 256, 256
      %26 = vsyncadd [#allocation6], %s25
      %s27 = sshll.u32 [#allocation5], 4
      %s28 = int_to_ptr.vmem [resolvable:$true] %s27
      %33 = dma.hbm_to_vmem [thread:$0]  %s1, 256, %s28, [#allocation6], 128, 128, 8
    $region9: #{tpu_custom_call.1} parent=1 // pred_fallthru
      _
    // Predicated region
    $region10: #{tpu_custom_call.1} parent=1 // pred_check
      _
    $region11: #{tpu_custom_call.1} parent=1 // pred_check_branch
      %35 = sbr.rel (0) target = $region13
    $region12: #{tpu_custom_call.1} parent=1 // pred_region
      %36 = dma.done [#allocation3], 256
    $region13: #{tpu_custom_call.1} parent=1 // pred_fallthru
      _
    // Predicated region
    $region14: #{tpu_custom_call.1} parent=1 // pred_check
      _
    $region15: #{tpu_custom_call.1} parent=1 // pred_check_branch
      %38 = sbr.rel (0) target = $region17
    $region16: #{tpu_custom_call.1} parent=1 // pred_region
      %39 = dma.done [#allocation6], 256
    $region17: #{tpu_custom_call.1} parent=1 // pred_fallthru
      _
    %v40 = vld [vmem:[#allocation2] sm:$0xff]
    %v41 = vld [vmem:[#allocation2 + $0x8] sm:$0xff]
    %v42 = vld [vmem:[#allocation5] sm:$0xff]
    %v43 = vld [vmem:[#allocation5 + $0x8] sm:$0xff]
    %v44 = vand.u32 2147483647, %v40
    %v45 = vand.u32 2147483647, %v41
    %v46 = vsub.f32 0.0, %v44
    %v47 = vsub.f32 0.0, %v45
    %v48 = vmul.f32 %v46, 1.442695
    %v49 = vpow.pop %v48
    %v50 = vmul.f32 %v47, 1.442695
    %v51 = vpow.pop %v50
    %v52 = vmax.f32 %v40, 0.0
    %v53 = vmax.f32 %v41, 0.0
    %v54 = vmul.f32 %v40, %v42
    %v55 = vmul.f32 %v41, %v43
    %v56 = vsub.f32 %v52, %v54
    %v57 = vsub.f32 %v53, %v55
    %v58 = vadd.f32 %v49, 1.0
    %v59 = vlog2.pop %v58
    %v60 = vmul.f32 %v59, 0.6931472
    %v61 = vmul.f32 -0.5, %v49
    %v62 = vadd.f32 %v61, 1.0
    %v63 = vmul.f32 %v62, %v49
    %v64 = vand.u32 2147483647, %v49
    %vm65 = vcmp.lt.f32.partialorder %v64, 0.0004427343
    %v66 = vsel %vm65, %v63, %v60
    %v67 = vadd.f32 %v51, 1.0
    %v68 = vlog2.pop %v67
    %v69 = vmul.f32 %v68, 0.6931472
    %v70 = vmul.f32 -0.5, %v51
    %v71 = vadd.f32 %v70, 1.0
    %v72 = vmul.f32 %v71, %v51
    %v73 = vand.u32 2147483647, %v51
    %vm74 = vcmp.lt.f32.partialorder %v73, 0.0004427343
    %v75 = vsel %vm74, %v72, %v69
    %v76 = vadd.f32 %v56, %v66
    %v77 = vadd.f32 %v57, %v75
    %v78 = vmul.f32 %v40, 0.5
    %v79 = vmul.f32 %v41, 0.5
    %v80 = vtanh.pop %v78
    %v81 = vtanh.pop %v79
    %v82 = vmul.f32 %v80, 0.5
    %v83 = vmul.f32 %v81, 0.5
    %v84 = vadd.f32 %v82, 0.5
    %v85 = vadd.f32 %v83, 0.5
    %v86 = vsub.f32 %v84, %v42
    %v87 = vsub.f32 %v85, %v43
    %v88 = vsub.f32 %v86, 1.0
    %v89 = vsub.f32 %v87, 1.0
    %v90 = vmul.f32 %v88, 19.96008
    %v91 = vmul.f32 %v89, 19.96008
    %v92 = vmul.f32 %v90, 1.442695
    %v93 = vpow.pop %v92
    %v94 = vmul.f32 %v91, 1.442695
    %v95 = vpow.pop %v94
    %v96 = vsub.f32 1.0, %v93
    %v97 = vsub.f32 1.0, %v95
    %v98 = vmul.f32 %v76, %v96
    %v99 = vmul.f32 %v77, %v97
    %v100 = vadd.f32 %v98, %v99
    %v101 = vadd.f32 %v100, 0.0
    %102 = vst [vmem:[#allocation7] sm:$0xff] %v101
    // Predicated region
    $region18: #{tpu_custom_call.1} parent=1 // pred_check
      _
    $region19: #{tpu_custom_call.1} parent=1 // pred_check_branch
      %104 = sbr.rel (0) target = $region21
    $region20: #{tpu_custom_call.1} parent=1 // pred_region
      %s106 = ssub.s32 128, 128
      %107 = vsyncadd [#allocation4], %s106
      %s109 = sshll.u32 [#allocation7], 4
      %s110 = int_to_ptr.vmem [resolvable:$true] %s109
      %112 = dma.vmem_to_hbm [thread:$0]  %s110, 128, %s2, [#allocation4]
    $region21: #{tpu_custom_call.1} parent=1 // pred_fallthru
      _
    // Predicated region
    $region22: #{tpu_custom_call.1} parent=1 // pred_check
      _
    $region23: #{tpu_custom_call.1} parent=1 // pred_check_branch
      %114 = sbr.rel (0) target = $region25
    $region24: #{tpu_custom_call.1} parent=1 // pred_region
      %115 = dma.done [#allocation4], 128
    $region25: #{tpu_custom_call.1} parent=1 // pred_fallthru
      _
    %116 = vsyncpa [#allocation3], 1
    %117 = vsyncpa [#allocation6], 1
    %118 = vsyncpa [#allocation4], 1

</llo_original>
